<compile_context>
chip_gen: v7x
topology: tpu7x:2x2x1
jax: 0.10.0
libtpu: 0.0.40
codegen_flags: <defaults>
</compile_context>

<pallas_src>
import functools
import math

import jax
import jax.numpy as jnp
from jax.experimental import pallas as pl
from jax.experimental.pallas import tpu as pltpu


# ----------------------------------------------------------------------------
# Pallas kernels
# ----------------------------------------------------------------------------
def _sdpa_kernel(q_ref, k_ref, v_ref, o_ref, *, inv_temp: float):
    """One batch element, all heads: softmax(Q K^T * inv_temp) @ V."""
    q = q_ref[0].astype(jnp.float32)            # (H, Sq, D)
    k = k_ref[0].astype(jnp.float32)            # (H, Sk, D)
    v = v_ref[0].astype(jnp.float32)            # (H, Sk, D)

    # Scores on the MXU, accumulated in f32.
    s = jnp.einsum("hqd,hkd->hqk", q, k,
                   preferred_element_type=jnp.float32) * inv_temp   # (H, Sq, Sk)

    # Numerically stable softmax over the key axis.
    s_max = jnp.max(s, axis=-1, keepdims=True)
    p = jnp.exp(s - s_max)
    denom = jnp.sum(p, axis=-1, keepdims=True)
    attn = p / denom

    out = jnp.einsum("hqk,hkd->hqd", attn, v,
                     preferred_element_type=jnp.float32)            # (H, Sq, D)
    o_ref[...] = out[None].astype(o_ref.dtype)


def _sdpa_mask_kernel(q_ref, k_ref, v_ref, m_ref, o_ref, *, inv_temp: float):
    """Same as above but with masked_fill(mask == 0, -1e9) before the softmax."""
    q = q_ref[0].astype(jnp.float32)            # (H, Sq, D)
    k = k_ref[0].astype(jnp.float32)            # (H, Sk, D)
    v = v_ref[0].astype(jnp.float32)            # (H, Sk, D)
    m = m_ref[0]                                # (H, Sq, Sk) int32

    s = jnp.einsum("hqd,hkd->hqk", q, k,
                   preferred_element_type=jnp.float32) * inv_temp
    s = jnp.where(m == 0, jnp.float32(-1e9), s)

    s_max = jnp.max(s, axis=-1, keepdims=True)
    p = jnp.exp(s - s_max)
    denom = jnp.sum(p, axis=-1, keepdims=True)
    attn = p / denom

    out = jnp.einsum("hqk,hkd->hqd", attn, v,
                     preferred_element_type=jnp.float32)
    o_ref[...] = out[None].astype(o_ref.dtype)


# ----------------------------------------------------------------------------
# Wrapper — mirrors ScaledDotProductAttention(embed_dim, num_heads).forward
# ----------------------------------------------------------------------------
def scaled_dot_product_attention(Q, K, V, mask=None, *, embed_dim: int, num_heads: int):
    """Q/K/V: (B, H, Sq/Sk, head_dim).  mask: broadcastable to (B, H, Sq, Sk) or None."""
    B, H, Sq, D = Q.shape
    _, _, Sk, _ = K.shape
    inv_temp = 1.0 / math.sqrt(embed_dim / num_heads)

    q_spec = pl.BlockSpec((1, H, Sq, D), lambda b: (b, 0, 0, 0))
    k_spec = pl.BlockSpec((1, H, Sk, D), lambda b: (b, 0, 0, 0))
    v_spec = pl.BlockSpec((1, H, Sk, D), lambda b: (b, 0, 0, 0))
    o_spec = pl.BlockSpec((1, H, Sq, D), lambda b: (b, 0, 0, 0))
    out_shape = jax.ShapeDtypeStruct((B, H, Sq, D), Q.dtype)
    cparams = pltpu.CompilerParams(dimension_semantics=("parallel",))

    if mask is None:
        kernel = functools.partial(_sdpa_kernel, inv_temp=inv_temp)
        return pl.pallas_call(
            kernel,
            out_shape=out_shape,
            grid=(B,),
            in_specs=[q_spec, k_spec, v_spec],
            out_specs=o_spec,
            compiler_params=cparams,
        )(Q, K, V)

    # masked_fill(mask == 0, -1e9): broadcast mask up front, ship as int32.
    mask_b = jnp.broadcast_to(mask, (B, H, Sq, Sk)).astype(jnp.int32)
    m_spec = pl.BlockSpec((1, H, Sq, Sk), lambda b: (b, 0, 0, 0))
    kernel = functools.partial(_sdpa_mask_kernel, inv_temp=inv_temp)
    return pl.pallas_call(
        kernel,
        out_shape=out_shape,
        grid=(B,),
        in_specs=[q_spec, k_spec, v_spec, m_spec],
        out_specs=o_spec,
        compiler_params=cparams,
    )(Q, K, V, mask_b)


# ----------------------------------------------------------------------------
# Demo / self-check
# ----------------------------------------------------------------------------
if __name__ == "__main__":
    embed_dim, num_heads = 128, 4
    B, S = 2, 8
    Dh = embed_dim // num_heads                 # 32
    temperature = math.sqrt(embed_dim / num_heads)

    key = jax.random.PRNGKey(0)
    kq, kk, kv, km = jax.random.split(key, 4)
    Q = jax.random.normal(kq, (B, num_heads, S, Dh), dtype=jnp.float32)
    K = jax.random.normal(kk, (B, num_heads, S, Dh), dtype=jnp.float32)
    V = jax.random.normal(kv, (B, num_heads, S, Dh), dtype=jnp.float32)

    # ---- no-mask path -------------------------------------------------------
    out = scaled_dot_product_attention(Q, K, V, embed_dim=embed_dim, num_heads=num_heads)
    out = jax.block_until_ready(out)

    scores = jnp.einsum("bhqd,bhkd->bhqk", Q, K) / temperature
    ref = jnp.einsum("bhqk,bhkd->bhqd", jax.nn.softmax(scores, axis=-1), V)
    assert out.shape == (B, num_heads, S, Dh)
    assert jnp.allclose(out, ref, atol=1e-5, rtol=1e-5), "mismatch vs reference (no mask)"

    # ---- masked path --------------------------------------------------------
    mask = (jax.random.uniform(km, (B, 1, S, S)) > 0.3).astype(jnp.int32)
    out_m = scaled_dot_product_attention(Q, K, V, mask,
                                         embed_dim=embed_dim, num_heads=num_heads)
    out_m = jax.block_until_ready(out_m)

    scores_m = jnp.where(mask == 0, -1e9, scores)
    ref_m = jnp.einsum("bhqk,bhkd->bhqd", jax.nn.softmax(scores_m, axis=-1), V)
    assert jnp.allclose(out_m, ref_m, atol=1e-5, rtol=1e-5), "mismatch vs reference (mask)"

    print("KERNEL_OK")
</pallas_src>

<mosaic_0001>
module attributes {stable_mosaic.version = 11 : i64} {
  func.func @_sdpa_kernel(%arg0: i32, %arg1: memref<1x4x8x32xf32, #tpu.memory_space<vmem>>, %arg2: memref<1x4x8x32xf32, #tpu.memory_space<vmem>>, %arg3: memref<1x4x8x32xf32, #tpu.memory_space<vmem>>, %arg4: memref<1x4x8x32xf32, #tpu.memory_space<vmem>>) attributes {dimension_semantics = [#tpu.dimension_semantics<parallel>], iteration_bounds = array<i64: 2>, scalar_prefetch = 0 : i64, scratch_operands = 0 : i64, tpu.core_type = #tpu.core_type<tc>, window_params = [{transform_indices = @transform_0, window_bounds = array<i64: 1, 4, 8, 32>}, {transform_indices = @transform_1, window_bounds = array<i64: 1, 4, 8, 32>}, {transform_indices = @transform_2, window_bounds = array<i64: 1, 4, 8, 32>}, {transform_indices = @transform_3, window_bounds = array<i64: 1, 4, 8, 32>}]} {
    %c0 = arith.constant 0 : index
    %c0_0 = arith.constant 0 : index
    %c0_1 = arith.constant 0 : index
    %c0_2 = arith.constant 0 : index
    %0 = vector.load %arg1[%c0, %c0_0, %c0_1, %c0_2] : memref<1x4x8x32xf32, #tpu.memory_space<vmem>>, vector<1x4x8x32xf32>
    %1 = vector.shape_cast %0 : vector<1x4x8x32xf32> to vector<4x8x32xf32>
    %c0_3 = arith.constant 0 : index
    %c0_4 = arith.constant 0 : index
    %c0_5 = arith.constant 0 : index
    %c0_6 = arith.constant 0 : index
    %2 = vector.load %arg2[%c0_3, %c0_4, %c0_5, %c0_6] : memref<1x4x8x32xf32, #tpu.memory_space<vmem>>, vector<1x4x8x32xf32>
    %3 = vector.shape_cast %2 : vector<1x4x8x32xf32> to vector<4x8x32xf32>
    %c0_7 = arith.constant 0 : index
    %c0_8 = arith.constant 0 : index
    %c0_9 = arith.constant 0 : index
    %c0_10 = arith.constant 0 : index
    %4 = vector.load %arg3[%c0_7, %c0_8, %c0_9, %c0_10] : memref<1x4x8x32xf32, #tpu.memory_space<vmem>>, vector<1x4x8x32xf32>
    %5 = vector.shape_cast %4 : vector<1x4x8x32xf32> to vector<4x8x32xf32>
    "tpu.trace_start"() <{level = 10 : i32, message = "hqd,hkd->hqk"}> : () -> ()
    %cst = arith.constant dense<0.000000e+00> : vector<4x8x8xf32>
    %6 = tpu.matmul %1, %3, %cst {dimension_numbers = #tpu.dot_dimension_numbers<[2], [2], [1], [1], [0, 0, 0, 1, 1, 1], [0], [0]>} : vector<4x8x32xf32>, vector<4x8x32xf32>, vector<4x8x8xf32> -> vector<4x8x8xf32>
    "tpu.trace_stop"() : () -> ()
    %cst_11 = arith.constant 0.176776692 : f32
    %7 = vector.broadcast %cst_11 : f32 to vector<4x8x8xf32>
    %8 = arith.mulf %6, %7 : vector<4x8x8xf32>
    %cst_12 = arith.constant dense<0xFF800000> : vector<4x8xf32>
    %9 = vector.multi_reduction <maximumf>, %8, %cst_12 [2] : vector<4x8x8xf32> to vector<4x8xf32>
    %10 = vector.shape_cast %9 : vector<4x8xf32> to vector<4x8x1xf32>
    %11 = vector.broadcast %10 : vector<4x8x1xf32> to vector<4x8x8xf32>
    %12 = arith.subf %8, %11 : vector<4x8x8xf32>
    %13 = math.exp %12 : vector<4x8x8xf32>
    %cst_13 = arith.constant dense<0.000000e+00> : vector<4x8xf32>
    %14 = vector.multi_reduction <add>, %13, %cst_13 [2] : vector<4x8x8xf32> to vector<4x8xf32>
    %15 = vector.shape_cast %14 : vector<4x8xf32> to vector<4x8x1xf32>
    %16 = vector.broadcast %15 : vector<4x8x1xf32> to vector<4x8x8xf32>
    %17 = arith.divf %13, %16 : vector<4x8x8xf32>
    "tpu.trace_start"() <{level = 10 : i32, message = "hqk,hkd->hqd"}> : () -> ()
    %cst_14 = arith.constant dense<0.000000e+00> : vector<4x8x32xf32>
    %18 = tpu.matmul %17, %5, %cst_14 {dimension_numbers = #tpu.dot_dimension_numbers<[2], [1], [1], [2], [0, 0, 0, 1, 1, 2], [0], [0]>} : vector<4x8x8xf32>, vector<4x8x32xf32>, vector<4x8x32xf32> -> vector<4x8x32xf32>
    "tpu.trace_stop"() : () -> ()
    %19 = vector.shape_cast %18 : vector<4x8x32xf32> to vector<1x4x8x32xf32>
    %c0_15 = arith.constant 0 : index
    %c0_16 = arith.constant 0 : index
    %c0_17 = arith.constant 0 : index
    %c0_18 = arith.constant 0 : index
    %20 = vector.load %arg4[%c0_15, %c0_16, %c0_17, %c0_18] : memref<1x4x8x32xf32, #tpu.memory_space<vmem>>, vector<1x4x8x32xf32>
    tpu.vector_store %arg4[%c0_15, %c0_16, %c0_17, %c0_18], %19 {strides = array<i32>} : memref<1x4x8x32xf32, #tpu.memory_space<vmem>>, vector<1x4x8x32xf32>,
    return
  }
  func.func @transform_0(%arg0: i32) -> (i32, i32, i32, i32) {
    %c0_i32 = arith.constant 0 : i32
    %c0_i32_0 = arith.constant 0 : i32
    %c0_i32_1 = arith.constant 0 : i32
    %c0_i32_2 = arith.constant 0 : i32
    return %arg0, %c0_i32, %c0_i32_0, %c0_i32_1 : i32, i32, i32, i32
  }
  func.func @transform_1(%arg0: i32) -> (i32, i32, i32, i32) {
    %c0_i32 = arith.constant 0 : i32
    %c0_i32_0 = arith.constant 0 : i32
    %c0_i32_1 = arith.constant 0 : i32
    %c0_i32_2 = arith.constant 0 : i32
    return %arg0, %c0_i32, %c0_i32_0, %c0_i32_1 : i32, i32, i32, i32
  }
  func.func @transform_2(%arg0: i32) -> (i32, i32, i32, i32) {
    %c0_i32 = arith.constant 0 : i32
    %c0_i32_0 = arith.constant 0 : i32
    %c0_i32_1 = arith.constant 0 : i32
    %c0_i32_2 = arith.constant 0 : i32
    return %arg0, %c0_i32, %c0_i32_0, %c0_i32_1 : i32, i32, i32, i32
  }
  func.func @transform_3(%arg0: i32) -> (i32, i32, i32, i32) {
    %c0_i32 = arith.constant 0 : i32
    %c0_i32_0 = arith.constant 0 : i32
    %c0_i32_1 = arith.constant 0 : i32
    %c0_i32_2 = arith.constant 0 : i32
    return %arg0, %c0_i32, %c0_i32_0, %c0_i32_1 : i32, i32, i32, i32
  }
}

</mosaic_0001>

<llo_original>
// kernel: tpu_custom_call.1
$region0: #{tpu_custom_call.1}
  #allocation0 [shape = 'u32[]', space=smem, size = 0x4, offset = 0x4, fixed_abs, tag = 'smem constant byte address 0x4 - core index']
  #allocation1 [shape = 'u32[144,128]{1,0:T(1,128)}', space=vmem, size = 0x12000, scoped, tag = 'internal scratch']
  %s0 = inlined_call_operand.hbm [shape: f32[2,4,8,32], index: 0, kind: input, shape index: {}]
  %s1 = inlined_call_operand.hbm [shape: f32[2,4,8,32], index: 1, kind: input, shape index: {}]
  %s2 = inlined_call_operand.hbm [shape: f32[2,4,8,32], index: 2, kind: input, shape index: {}]
  %s3 = inlined_call_operand.hbm [shape: f32[2,4,8,32], index: 3, kind: output, shape index: {}]
  %s4 = sld [smem:[#allocation0]]
  $region57: #{tpu_custom_call.1} parent=0
    _
  %s6 = ssub.s32 1, %s4
  %s7 = scalar_select 0, %s6, %s4
  $region1: #{tpu_custom_call.1} parent=0
    #allocation2 [shape = 'u8[32768]{0}', space=vmem, size = 0x8000, scoped, tag = 'input window, operand 0']
    #allocation3 [shape = 's32[2]{0}', space=sflag, size = 0x8, scoped, tag = 'scoped memory for tpu_custom_call.1']
    #allocation4 [shape = 's32[2]{0}', space=sflag, size = 0x8, scoped, tag = 'scoped memory for tpu_custom_call.1']
    #allocation5 [shape = 'u8[32768]{0}', space=vmem, size = 0x8000, scoped, tag = 'input window, operand 1']
    #allocation6 [shape = 's32[2]{0}', space=sflag, size = 0x8, scoped, tag = 'scoped memory for tpu_custom_call.1']
    #allocation7 [shape = 'u8[32768]{0}', space=vmem, size = 0x8000, scoped, tag = 'input window, operand 2']
    #allocation8 [shape = 'u8[32768]{0}', space=vmem, size = 0x8000, scoped, tag = 'output window, operand 0']
    %8 = vsyncpa [#allocation3], 0
    %s9 = scalar_lea.sflag [#allocation3], 1
    %10 = vsyncpa %s9, 0
    %11 = vsyncpa [#allocation6], 0
    %s12 = scalar_lea.sflag [#allocation6], 1
    %13 = vsyncpa %s12, 0
    %14 = vsyncpa [#allocation4], 0
    %s15 = scalar_lea.sflag [#allocation4], 1
    %16 = vsyncpa %s15, 0
    loop: start=0, step=1, limit=4
    $region2: #{tpu_custom_call.1} parent=1 // loop_pre_header
      _
    $region3: #{tpu_custom_call.1} parent=1 // loop_header
      %s18 = sphi 0, %s22
      %p19 = scmp.ge.s32.totalorder %s18, 4
      %s28 = sphi 0, %s30
      %s31 = sphi 0, %s28
      %s32 = sphi 0, %s31
      %s48 = sphi 0, %s32
      %s54 = sphi 0, %s56
      %s57 = sphi 0, %s54
      %s58 = sphi 0, %s57
      %s74 = sphi 0, %s58
      %s80 = sphi 0, %s82
      %s83 = sphi 0, %s80
      %s84 = sphi 0, %s83
      %s100 = sphi 0, %s84
      %s106 = sphi 0, %s108
      %s109 = sphi 0, %s106
      %s110 = sphi 0, %s109
      %s126 = sphi 0, %s110
    $region4: #{tpu_custom_call.1} parent=1 // loop_header_branch
      %21 = sbr.rel (%p19) target = $region8
    $region5: #{tpu_custom_call.1} parent=1 // loop_body
      %s23 = ssub.s32 %s18, 1
      %s24 = ssub.s32 %s18, 2
      %s25 = sadd.s32 %s18, 1
      %s26 = ssub.s32 %s18, %s25
      %p27 = scmp.eq.s32.totalorder %s26, 0
      %s29 = sadd.s32 %s28, 1
      %s30 = scalar_select %p27, %s28, %s29
      %p33 = pneg %p27
      %p34 = scmp.eq.s32.totalorder %s18, 1
      %p35 = por %p33, %p34
      %p36 = scmp.ne.s32.totalorder %s28, %s31
      %p37 = scmp.eq.s32.totalorder %s18, 0
      %p38 = por %p36, %p37
      %p39 = scmp.ne.s32.totalorder %s28, %s31
      %p40 = scmp.eq.s32.totalorder %s23, 1
      %p41 = por %p39, %p40
      %p42 = scmp.ne.s32.totalorder %s31, %s32
      %p43 = scmp.eq.s32.totalorder %s23, 0
      %p44 = por %p42, %p43
      %p45 = scmp.ne.s32.totalorder %s31, %s32
      %p46 = scmp.eq.s32.totalorder %s24, 1
      %p47 = por %p45, %p46
      %p49 = scmp.ne.s32.totalorder %s32, %s48
      %p50 = scmp.eq.s32.totalorder %s24, 0
      %p51 = por %p49, %p50
      %s52 = ssub.s32 %s18, %s25
      %p53 = scmp.eq.s32.totalorder %s52, 0
      %s55 = sadd.s32 %s54, 1
      %s56 = scalar_select %p53, %s54, %s55
      %p59 = pneg %p53
      %p60 = scmp.eq.s32.totalorder %s18, 1
      %p61 = por %p59, %p60
      %p62 = scmp.ne.s32.totalorder %s54, %s57
      %p63 = scmp.eq.s32.totalorder %s18, 0
      %p64 = por %p62, %p63
      %p65 = scmp.ne.s32.totalorder %s54, %s57
      %p66 = scmp.eq.s32.totalorder %s23, 1
      %p67 = por %p65, %p66
      %p68 = scmp.ne.s32.totalorder %s57, %s58
      %p69 = scmp.eq.s32.totalorder %s23, 0
      %p70 = por %p68, %p69
      %p71 = scmp.ne.s32.totalorder %s57, %s58
      %p72 = scmp.eq.s32.totalorder %s24, 1
      %p73 = por %p71, %p72
      %p75 = scmp.ne.s32.totalorder %s58, %s74
      %p76 = scmp.eq.s32.totalorder %s24, 0
      %p77 = por %p75, %p76
      %s78 = ssub.s32 %s18, %s25
      %p79 = scmp.eq.s32.totalorder %s78, 0
      %s81 = sadd.s32 %s80, 1
      %s82 = scalar_select %p79, %s80, %s81
      %p85 = pneg %p79
      %p86 = scmp.eq.s32.totalorder %s18, 1
      %p87 = por %p85, %p86
      %p88 = scmp.ne.s32.totalorder %s80, %s83
      %p89 = scmp.eq.s32.totalorder %s18, 0
      %p90 = por %p88, %p89
      %p91 = scmp.ne.s32.totalorder %s80, %s83
      %p92 = scmp.eq.s32.totalorder %s23, 1
      %p93 = por %p91, %p92
      %p94 = scmp.ne.s32.totalorder %s83, %s84
      %p95 = scmp.eq.s32.totalorder %s23, 0
      %p96 = por %p94, %p95
      %p97 = scmp.ne.s32.totalorder %s83, %s84
      %p98 = scmp.eq.s32.totalorder %s24, 1
      %p99 = por %p97, %p98
      %p101 = scmp.ne.s32.totalorder %s84, %s100
      %p102 = scmp.eq.s32.totalorder %s24, 0
      %p103 = por %p101, %p102
      %s104 = ssub.s32 %s18, %s25
      %p105 = scmp.eq.s32.totalorder %s104, 0
      %s107 = sadd.s32 %s106, 1
      %s108 = scalar_select %p105, %s106, %s107
      %p111 = pneg %p105
      %p112 = scmp.eq.s32.totalorder %s18, 1
      %p113 = por %p111, %p112
      %p114 = scmp.ne.s32.totalorder %s106, %s109
      %p115 = scmp.eq.s32.totalorder %s18, 0
      %p116 = por %p114, %p115
      %p117 = scmp.ne.s32.totalorder %s106, %s109
      %p118 = scmp.eq.s32.totalorder %s23, 1
      %p119 = por %p117, %p118
      %p120 = scmp.ne.s32.totalorder %s109, %s110
      %p121 = scmp.eq.s32.totalorder %s23, 0
      %p122 = por %p120, %p121
      %p123 = scmp.ne.s32.totalorder %s109, %s110
      %p124 = scmp.eq.s32.totalorder %s24, 1
      %p125 = por %p123, %p124
      %p127 = scmp.ne.s32.totalorder %s110, %s126
      %p128 = scmp.eq.s32.totalorder %s24, 0
      %p129 = por %p127, %p128
      %p130 = scmp.le.s32.totalorder 1, %s18
      %p131 = scmp.lt.s32.totalorder %s18, 3
      %p132 = pnand %p130, %p131
      %p133 = pneg %p132
      // Predicated region
      $region9: #{tpu_custom_call.1} parent=5 // pred_check
        _
      $region10: #{tpu_custom_call.1} parent=5 // pred_check_branch
        %135 = sbr.rel (%p132) target = $region12
      $region11: #{tpu_custom_call.1} parent=5 // pred_region
        %s136 = ssub.s32 %s18, 1
      $region12: #{tpu_custom_call.1} parent=5 // pred_fallthru
        _
      %p137 = scmp.lt.s32.totalorder %s18, 2
      // Predicated region
      $region13: #{tpu_custom_call.1} parent=5 // pred_check
        %p138 = pneg %p137
      $region14: #{tpu_custom_call.1} parent=5 // pred_check_branch
        %140 = sbr.rel (%p138) target = $region16
      $region15: #{tpu_custom_call.1} parent=5 // pred_region
        // Predicated region
        $region17: #{tpu_custom_call.1} parent=15 // pred_check
          %p141 = pneg %p38
        $region18: #{tpu_custom_call.1} parent=15 // pred_check_branch
          %143 = sbr.rel (%p141) target = $region20
        $region19: #{tpu_custom_call.1} parent=15 // pred_region
          %s144 = sand.u32 %s28, 1
          %s145 = scalar_lea.sflag [#allocation3], %s144
          %s146 = sand.u32 %s28, 1
          %s147 = smul.addr %s146, 32
          %s148 = scalar_lea.vmem [#allocation2], %s147
          %s150 = ssub.s32 512, 512
          %151 = vsyncadd %s145, %s150
          %s152 = smul.addr %s18, 4
          %s153 = smul.addr %s152, 128
          %s154 = scalar_lea.hbm %s0, %s153
          %s155 = sshll.u32 %s148, 4
          %s156 = int_to_ptr.vmem [resolvable:$true] %s155
          %161 = dma.hbm_to_vmem [thread:$0]  %s154, 512, %s156, %s145, 128, 128, 8
        $region20: #{tpu_custom_call.1} parent=15 // pred_fallthru
          _
        // Predicated region
        $region21: #{tpu_custom_call.1} parent=15 // pred_check
          %p162 = pneg %p64
        $region22: #{tpu_custom_call.1} parent=15 // pred_check_branch
          %164 = sbr.rel (%p162) target = $region24
        $region23: #{tpu_custom_call.1} parent=15 // pred_region
          %s165 = sand.u32 %s18, 1
          %s166 = scalar_lea.sflag [#allocation6], %s165
          %s167 = sand.u32 %s54, 1
          %s168 = smul.addr %s167, 32
          %s169 = scalar_lea.vmem [#allocation5], %s168
          %s171 = ssub.s32 512, 512
          %172 = vsyncadd %s166, %s171
          %s173 = smul.addr %s18, 4
          %s174 = smul.addr %s173, 128
          %s175 = scalar_lea.hbm %s1, %s174
          %s176 = sshll.u32 %s169, 4
          %s177 = int_to_ptr.vmem [resolvable:$true] %s176
          %182 = dma.hbm_to_vmem [thread:$0]  %s175, 512, %s177, %s166, 128, 128, 8
        $region24: #{tpu_custom_call.1} parent=15 // pred_fallthru
          _
        // Predicated region
        $region25: #{tpu_custom_call.1} parent=15 // pred_check
          %p183 = pneg %p90
        $region26: #{tpu_custom_call.1} parent=15 // pred_check_branch
          %185 = sbr.rel (%p183) target = $region28
        $region27: #{tpu_custom_call.1} parent=15 // pred_region
          %s186 = sand.u32 %s18, 1
          %s187 = scalar_lea.sflag [#allocation6], %s186
          %s188 = sand.u32 %s80, 1
          %s189 = smul.addr %s188, 32
          %s190 = scalar_lea.vmem [#allocation7], %s189
          %s192 = ssub.s32 512, 512
          %193 = vsyncadd %s187, %s192
          %s194 = smul.addr %s18, 4
          %s195 = smul.addr %s194, 128
          %s196 = scalar_lea.hbm %s2, %s195
          %s197 = sshll.u32 %s190, 4
          %s198 = int_to_ptr.vmem [resolvable:$true] %s197
          %203 = dma.hbm_to_vmem [thread:$0]  %s196, 512, %s198, %s187, 128, 128, 8
        $region28: #{tpu_custom_call.1} parent=15 // pred_fallthru
          _
      $region16: #{tpu_custom_call.1} parent=5 // pred_fallthru
        _
      %p204 = scmp.le.s32.totalorder 1, %s18
      %p205 = scmp.lt.s32.totalorder %s18, 3
      %p206 = pnand %p204, %p205
      %p207 = pneg %p206
      // Predicated region
      $region29: #{tpu_custom_call.1} parent=5 // pred_check
        _
      $region30: #{tpu_custom_call.1} parent=5 // pred_check_branch
        %209 = sbr.rel (%p206) target = $region32
      $region31: #{tpu_custom_call.1} parent=5 // pred_region
        %s210 = ssub.s32 %s18, 1
        %s211 = sand.u32 %s31, 1
        %s212 = scalar_lea.sflag [#allocation3], %s211
        %s213 = sand.u32 %s31, 1
        %s214 = smul.addr %s213, 32
        %s215 = scalar_lea.vmem [#allocation2], %s214
        // Predicated region
        $region33: #{tpu_custom_call.1} parent=31 // pred_check
          %p216 = pneg %p44
        $region34: #{tpu_custom_call.1} parent=31 // pred_check_branch
          %218 = sbr.rel (%p216) target = $region36
        $region35: #{tpu_custom_call.1} parent=31 // pred_region
          %219 = dma.done %s212, 512
        $region36: #{tpu_custom_call.1} parent=31 // pred_fallthru
          _
        %s220 = sand.u32 %s23, 1
        %s221 = scalar_lea.sflag [#allocation6], %s220
        %s222 = sand.u32 %s57, 1
        %s223 = smul.addr %s222, 32
        %s224 = scalar_lea.vmem [#allocation5], %s223
        // Predicated region
        $region37: #{tpu_custom_call.1} parent=31 // pred_check
          %p225 = pneg %p70
        $region38: #{tpu_custom_call.1} parent=31 // pred_check_branch
          %227 = sbr.rel (%p225) target = $region40
        $region39: #{tpu_custom_call.1} parent=31 // pred_region
          %228 = dma.done %s221, 512
        $region40: #{tpu_custom_call.1} parent=31 // pred_fallthru
          _
        %s229 = sand.u32 %s23, 1
        %s230 = scalar_lea.sflag [#allocation6], %s229
        %s231 = sand.u32 %s83, 1
        %s232 = smul.addr %s231, 32
        %s233 = scalar_lea.vmem [#allocation7], %s232
        // Predicated region
        $region41: #{tpu_custom_call.1} parent=31 // pred_check
          %p234 = pneg %p96
        $region42: #{tpu_custom_call.1} parent=31 // pred_check_branch
          %236 = sbr.rel (%p234) target = $region44
        $region43: #{tpu_custom_call.1} parent=31 // pred_region
          %237 = dma.done %s230, 512
        $region44: #{tpu_custom_call.1} parent=31 // pred_fallthru
          _
        %s238 = sand.u32 %s31, 1
        %s239 = scalar_lea.sflag [#allocation3], %s238
        %s240 = sand.u32 %s31, 1
        %s241 = smul.addr %s240, 32
        %s242 = scalar_lea.vmem [#allocation2], %s241
        %p243 = pneg %p44
        %p244 = pneg %p41
        %s245 = sand.u32 %s23, 1
        %s246 = scalar_lea.sflag [#allocation6], %s245
        %s247 = sand.u32 %s57, 1
        %s248 = smul.addr %s247, 32
        %s249 = scalar_lea.vmem [#allocation5], %s248
        %p250 = pneg %p70
        %p251 = pneg %p67
        %s252 = sand.u32 %s23, 1
        %s253 = scalar_lea.sflag [#allocation6], %s252
        %s254 = sand.u32 %s83, 1
        %s255 = smul.addr %s254, 32
        %s256 = scalar_lea.vmem [#allocation7], %s255
        %p257 = pneg %p96
        %p258 = pneg %p93
        %p259 = pneg %p122
        %p260 = pneg %p119
        %s261 = sand.u32 %s109, 1
        %s262 = scalar_lea.sflag [#allocation4], %s261
        %s263 = sand.u32 %s109, 1
        %s264 = smul.addr %s263, 32
        %s265 = scalar_lea.vmem [#allocation8], %s264
        %v266 = vld [vmem:[%s215] sm:$0xff]
        %v267 = vld [vmem:[%s215 + $0x8] sm:$0xff]
        %v268 = vld [vmem:[%s215 + $0x10] sm:$0xff]
        %v269 = vld [vmem:[%s215 + $0x18] sm:$0xff]
        %v270 = vld [vmem:[%s224] sm:$0xff]
        %v271 = vld [vmem:[%s224 + $0x8] sm:$0xff]
        %v272 = vld [vmem:[%s224 + $0x10] sm:$0xff]
        %v273 = vld [vmem:[%s224 + $0x18] sm:$0xff]
        %v274 = vld [vmem:[%s233] sm:$0xff]
        %v275 = vld [vmem:[%s233 + $0x8] sm:$0xff]
        %v276 = vld [vmem:[%s233 + $0x10] sm:$0xff]
        %v277 = vld [vmem:[%s233 + $0x18] sm:$0xff]
        %vm278 = vcmask 261120
        %v280 = vsel %vm278, %v266, 0
        %v283 = vsel %vm278, %v270, 0
        %285 = vmatprep.subr.mxu0 0.0
        %286 = vmatpush1.xpose.msra.mxu0 %v283
        %287 = vmatprep.subr.mxu0 0.0
        %288 = vmatpush1.xpose.msra.mxu0 0.0
        %289 = vmatprep.subr.mxu0 0.0
        %290 = vmatpush1.xpose.msra.mxu0 0.0
        %291 = vmatprep.subr.mxu0 0.0
        %292 = vmatpush1.xpose.msra.mxu0 0.0
        %293 = vmatprep.subr.mxu0 0.0
        %294 = vmatpush1.xpose.msra.mxu0 0.0
        %295 = vmatprep.subr.mxu0 0.0
        %296 = vmatpush1.xpose.msra.mxu0 0.0
        %297 = vmatprep.subr.mxu0 0.0
        %298 = vmatpush1.xpose.msra.mxu0 0.0
        %299 = vmatprep.subr.mxu0 0.0
        %300 = vmatpush1.xpose.msra.mxu0 0.0
        %301 = vmatprep.subr.mxu0 0.0
        %302 = vmatpush1.xpose.msra.mxu0 0.0
        %303 = vmatprep.subr.mxu0 0.0
        %304 = vmatpush1.xpose.msra.mxu0 0.0
        %305 = vmatprep.subr.mxu0 0.0
        %306 = vmatpush1.xpose.msra.mxu0 0.0
        %307 = vmatprep.subr.mxu0 0.0
        %308 = vmatpush1.xpose.msra.mxu0 0.0
        %309 = vmatprep.subr.mxu0 0.0
        %310 = vmatpush1.xpose.msra.mxu0 0.0
        %311 = vmatprep.subr.mxu0 0.0
        %312 = vmatpush1.xpose.msra.mxu0 0.0
        %313 = vmatprep.subr.mxu0 0.0
        %314 = vmatpush1.xpose.msra.mxu0 0.0
        %315 = vmatprep.subr.mxu0 0.0
        %316 = vmatpush1.xpose.msra.mxu0 0.0
        %317 = vmatprep.subr.mxu0 0.0
        %318 = vmatpush1.xpose.msra.mxu0 0.0
        %319 = vmatprep.subr.mxu0 0.0
        %320 = vmatpush1.xpose.msra.mxu0 0.0
        %321 = vmatprep.subr.mxu0 0.0
        %322 = vmatpush1.xpose.msra.mxu0 0.0
        %323 = vmatprep.subr.mxu0 0.0
        %324 = vmatpush1.xpose.msra.mxu0 0.0
        %325 = vmatprep.subr.mxu0 0.0
        %326 = vmatpush1.xpose.msra.mxu0 0.0
        %327 = vmatprep.subr.mxu0 0.0
        %328 = vmatpush1.xpose.msra.mxu0 0.0
        %329 = vmatprep.subr.mxu0 0.0
        %330 = vmatpush1.xpose.msra.mxu0 0.0
        %331 = vmatprep.subr.mxu0 0.0
        %332 = vmatpush1.xpose.msra.mxu0 0.0
        %333 = vmatprep.subr.mxu0 0.0
        %334 = vmatpush1.xpose.msra.mxu0 0.0
        %335 = vmatprep.subr.mxu0 0.0
        %336 = vmatpush1.xpose.msra.mxu0 0.0
        %337 = vmatprep.subr.mxu0 0.0
        %338 = vmatpush1.xpose.msra.mxu0 0.0
        %339 = vmatprep.subr.mxu0 0.0
        %340 = vmatpush1.xpose.msra.mxu0 0.0
        %341 = vmatprep.subr.mxu0 0.0
        %342 = vmatpush1.xpose.msra.mxu0 0.0
        %343 = vmatprep.subr.mxu0 0.0
        %344 = vmatpush1.xpose.msra.mxu0 0.0
        %345 = vmatprep.subr.mxu0 0.0
        %346 = vmatpush1.xpose.msra.mxu0 0.0
        %347 = vmatprep.subr.mxu0 0.0
        %348 = vmatpush1.xpose.msra.mxu0 0.0
        %349 = vmatprep.mubr.f32.mxu0 0.0
        %350 = vmatmul.mubr.f32.gmra.mrb[0].mxu0 %v280
        %v351 = vpop.f32.mrb[0].mxu0
        %v352 = vadd.f32 0.0, %v351
        %v353 = vpop.f32.mrb[0].mxu0
        %354 = vdwg.mxu0
        %v356 = vsel %vm278, %v267, 0
        %v359 = vsel %vm278, %v271, 0
        %361 = vmatprep.subr.mxu0 0.0
        %362 = vmatpush1.xpose.msra.mxu0 %v359
        %363 = vmatprep.subr.mxu0 0.0
        %364 = vmatpush1.xpose.msra.mxu0 0.0
        %365 = vmatprep.subr.mxu0 0.0
        %366 = vmatpush1.xpose.msra.mxu0 0.0
        %367 = vmatprep.subr.mxu0 0.0
        %368 = vmatpush1.xpose.msra.mxu0 0.0
        %369 = vmatprep.subr.mxu0 0.0
        %370 = vmatpush1.xpose.msra.mxu0 0.0
        %371 = vmatprep.subr.mxu0 0.0
        %372 = vmatpush1.xpose.msra.mxu0 0.0
        %373 = vmatprep.subr.mxu0 0.0
        %374 = vmatpush1.xpose.msra.mxu0 0.0
        %375 = vmatprep.subr.mxu0 0.0
        %376 = vmatpush1.xpose.msra.mxu0 0.0
        %377 = vmatprep.subr.mxu0 0.0
        %378 = vmatpush1.xpose.msra.mxu0 0.0
        %379 = vmatprep.subr.mxu0 0.0
        %380 = vmatpush1.xpose.msra.mxu0 0.0
        %381 = vmatprep.subr.mxu0 0.0
        %382 = vmatpush1.xpose.msra.mxu0 0.0
        %383 = vmatprep.subr.mxu0 0.0
        %384 = vmatpush1.xpose.msra.mxu0 0.0
        %385 = vmatprep.subr.mxu0 0.0
        %386 = vmatpush1.xpose.msra.mxu0 0.0
        %387 = vmatprep.subr.mxu0 0.0
        %388 = vmatpush1.xpose.msra.mxu0 0.0
        %389 = vmatprep.subr.mxu0 0.0
        %390 = vmatpush1.xpose.msra.mxu0 0.0
        %391 = vmatprep.subr.mxu0 0.0
        %392 = vmatpush1.xpose.msra.mxu0 0.0
        %393 = vmatprep.subr.mxu0 0.0
        %394 = vmatpush1.xpose.msra.mxu0 0.0
        %395 = vmatprep.subr.mxu0 0.0
        %396 = vmatpush1.xpose.msra.mxu0 0.0
        %397 = vmatprep.subr.mxu0 0.0
        %398 = vmatpush1.xpose.msra.mxu0 0.0
        %399 = vmatprep.subr.mxu0 0.0
        %400 = vmatpush1.xpose.msra.mxu0 0.0
        %401 = vmatprep.subr.mxu0 0.0
        %402 = vmatpush1.xpose.msra.mxu0 0.0
        %403 = vmatprep.subr.mxu0 0.0
        %404 = vmatpush1.xpose.msra.mxu0 0.0
        %405 = vmatprep.subr.mxu0 0.0
        %406 = vmatpush1.xpose.msra.mxu0 0.0
        %407 = vmatprep.subr.mxu0 0.0
        %408 = vmatpush1.xpose.msra.mxu0 0.0
        %409 = vmatprep.subr.mxu0 0.0
        %410 = vmatpush1.xpose.msra.mxu0 0.0
        %411 = vmatprep.subr.mxu0 0.0
        %412 = vmatpush1.xpose.msra.mxu0 0.0
        %413 = vmatprep.subr.mxu0 0.0
        %414 = vmatpush1.xpose.msra.mxu0 0.0
        %415 = vmatprep.subr.mxu0 0.0
        %416 = vmatpush1.xpose.msra.mxu0 0.0
        %417 = vmatprep.subr.mxu0 0.0
        %418 = vmatpush1.xpose.msra.mxu0 0.0
        %419 = vmatprep.subr.mxu0 0.0
        %420 = vmatpush1.xpose.msra.mxu0 0.0
        %421 = vmatprep.subr.mxu0 0.0
        %422 = vmatpush1.xpose.msra.mxu0 0.0
        %423 = vmatprep.subr.mxu0 0.0
        %424 = vmatpush1.xpose.msra.mxu0 0.0
        %425 = vmatprep.mubr.f32.mxu0 0.0
        %426 = vmatmul.mubr.f32.gmra.mrb[0].mxu0 %v356
        %v427 = vpop.f32.mrb[0].mxu0
        %v428 = vadd.f32 0.0, %v427
        %v429 = vpop.f32.mrb[0].mxu0
        %430 = vdwg.mxu0
        %v432 = vsel %vm278, %v268, 0
        %v435 = vsel %vm278, %v272, 0
        %437 = vmatprep.subr.mxu0 0.0
        %438 = vmatpush1.xpose.msra.mxu0 %v435
        %439 = vmatprep.subr.mxu0 0.0
        %440 = vmatpush1.xpose.msra.mxu0 0.0
        %441 = vmatprep.subr.mxu0 0.0
        %442 = vmatpush1.xpose.msra.mxu0 0.0
        %443 = vmatprep.subr.mxu0 0.0
        %444 = vmatpush1.xpose.msra.mxu0 0.0
        %445 = vmatprep.subr.mxu0 0.0
        %446 = vmatpush1.xpose.msra.mxu0 0.0
        %447 = vmatprep.subr.mxu0 0.0
        %448 = vmatpush1.xpose.msra.mxu0 0.0
        %449 = vmatprep.subr.mxu0 0.0
        %450 = vmatpush1.xpose.msra.mxu0 0.0
        %451 = vmatprep.subr.mxu0 0.0
        %452 = vmatpush1.xpose.msra.mxu0 0.0
        %453 = vmatprep.subr.mxu0 0.0
        %454 = vmatpush1.xpose.msra.mxu0 0.0
        %455 = vmatprep.subr.mxu0 0.0
        %456 = vmatpush1.xpose.msra.mxu0 0.0
        %457 = vmatprep.subr.mxu0 0.0
        %458 = vmatpush1.xpose.msra.mxu0 0.0
        %459 = vmatprep.subr.mxu0 0.0
        %460 = vmatpush1.xpose.msra.mxu0 0.0
        %461 = vmatprep.subr.mxu0 0.0
        %462 = vmatpush1.xpose.msra.mxu0 0.0
        %463 = vmatprep.subr.mxu0 0.0
        %464 = vmatpush1.xpose.msra.mxu0 0.0
        %465 = vmatprep.subr.mxu0 0.0
        %466 = vmatpush1.xpose.msra.mxu0 0.0
        %467 = vmatprep.subr.mxu0 0.0
        %468 = vmatpush1.xpose.msra.mxu0 0.0
        %469 = vmatprep.subr.mxu0 0.0
        %470 = vmatpush1.xpose.msra.mxu0 0.0
        %471 = vmatprep.subr.mxu0 0.0
        %472 = vmatpush1.xpose.msra.mxu0 0.0
        %473 = vmatprep.subr.mxu0 0.0
        %474 = vmatpush1.xpose.msra.mxu0 0.0
        %475 = vmatprep.subr.mxu0 0.0
        %476 = vmatpush1.xpose.msra.mxu0 0.0
        %477 = vmatprep.subr.mxu0 0.0
        %478 = vmatpush1.xpose.msra.mxu0 0.0
        %479 = vmatprep.subr.mxu0 0.0
        %480 = vmatpush1.xpose.msra.mxu0 0.0
        %481 = vmatprep.subr.mxu0 0.0
        %482 = vmatpush1.xpose.msra.mxu0 0.0
        %483 = vmatprep.subr.mxu0 0.0
        %484 = vmatpush1.xpose.msra.mxu0 0.0
        %485 = vmatprep.subr.mxu0 0.0
        %486 = vmatpush1.xpose.msra.mxu0 0.0
        %487 = vmatprep.subr.mxu0 0.0
        %488 = vmatpush1.xpose.msra.mxu0 0.0
        %489 = vmatprep.subr.mxu0 0.0
        %490 = vmatpush1.xpose.msra.mxu0 0.0
        %491 = vmatprep.subr.mxu0 0.0
        %492 = vmatpush1.xpose.msra.mxu0 0.0
        %493 = vmatprep.subr.mxu0 0.0
        %494 = vmatpush1.xpose.msra.mxu0 0.0
        %495 = vmatprep.subr.mxu0 0.0
        %496 = vmatpush1.xpose.msra.mxu0 0.0
        %497 = vmatprep.subr.mxu0 0.0
        %498 = vmatpush1.xpose.msra.mxu0 0.0
        %499 = vmatprep.subr.mxu0 0.0
        %500 = vmatpush1.xpose.msra.mxu0 0.0
        %501 = vmatprep.mubr.f32.mxu0 0.0
        %502 = vmatmul.mubr.f32.gmra.mrb[0].mxu0 %v432
        %v503 = vpop.f32.mrb[0].mxu0
        %v504 = vadd.f32 0.0, %v503
        %v505 = vpop.f32.mrb[0].mxu0
        %506 = vdwg.mxu0
        %v508 = vsel %vm278, %v269, 0
        %v511 = vsel %vm278, %v273, 0
        %513 = vmatprep.subr.mxu0 0.0
        %514 = vmatpush1.xpose.msra.mxu0 %v511
        %515 = vmatprep.subr.mxu0 0.0
        %516 = vmatpush1.xpose.msra.mxu0 0.0
        %517 = vmatprep.subr.mxu0 0.0
        %518 = vmatpush1.xpose.msra.mxu0 0.0
        %519 = vmatprep.subr.mxu0 0.0
        %520 = vmatpush1.xpose.msra.mxu0 0.0
        %521 = vmatprep.subr.mxu0 0.0
        %522 = vmatpush1.xpose.msra.mxu0 0.0
        %523 = vmatprep.subr.mxu0 0.0
        %524 = vmatpush1.xpose.msra.mxu0 0.0
        %525 = vmatprep.subr.mxu0 0.0
        %526 = vmatpush1.xpose.msra.mxu0 0.0
        %527 = vmatprep.subr.mxu0 0.0
        %528 = vmatpush1.xpose.msra.mxu0 0.0
        %529 = vmatprep.subr.mxu0 0.0
        %530 = vmatpush1.xpose.msra.mxu0 0.0
        %531 = vmatprep.subr.mxu0 0.0
        %532 = vmatpush1.xpose.msra.mxu0 0.0
        %533 = vmatprep.subr.mxu0 0.0
        %534 = vmatpush1.xpose.msra.mxu0 0.0
        %535 = vmatprep.subr.mxu0 0.0
        %536 = vmatpush1.xpose.msra.mxu0 0.0
        %537 = vmatprep.subr.mxu0 0.0
        %538 = vmatpush1.xpose.msra.mxu0 0.0
        %539 = vmatprep.subr.mxu0 0.0
        %540 = vmatpush1.xpose.msra.mxu0 0.0
        %541 = vmatprep.subr.mxu0 0.0
        %542 = vmatpush1.xpose.msra.mxu0 0.0
        %543 = vmatprep.subr.mxu0 0.0
        %544 = vmatpush1.xpose.msra.mxu0 0.0
        %545 = vmatprep.subr.mxu0 0.0
        %546 = vmatpush1.xpose.msra.mxu0 0.0
        %547 = vmatprep.subr.mxu0 0.0
        %548 = vmatpush1.xpose.msra.mxu0 0.0
        %549 = vmatprep.subr.mxu0 0.0
        %550 = vmatpush1.xpose.msra.mxu0 0.0
        %551 = vmatprep.subr.mxu0 0.0
        %552 = vmatpush1.xpose.msra.mxu0 0.0
        %553 = vmatprep.subr.mxu0 0.0
        %554 = vmatpush1.xpose.msra.mxu0 0.0
        %555 = vmatprep.subr.mxu0 0.0
        %556 = vmatpush1.xpose.msra.mxu0 0.0
        %557 = vmatprep.subr.mxu0 0.0
        %558 = vmatpush1.xpose.msra.mxu0 0.0
        %559 = vmatprep.subr.mxu0 0.0
        %560 = vmatpush1.xpose.msra.mxu0 0.0
        %561 = vmatprep.subr.mxu0 0.0
        %562 = vmatpush1.xpose.msra.mxu0 0.0
        %563 = vmatprep.subr.mxu0 0.0
        %564 = vmatpush1.xpose.msra.mxu0 0.0
        %565 = vmatprep.subr.mxu0 0.0
        %566 = vmatpush1.xpose.msra.mxu0 0.0
        %567 = vmatprep.subr.mxu0 0.0
        %568 = vmatpush1.xpose.msra.mxu0 0.0
        %569 = vmatprep.subr.mxu0 0.0
        %570 = vmatpush1.xpose.msra.mxu0 0.0
        %571 = vmatprep.subr.mxu0 0.0
        %572 = vmatpush1.xpose.msra.mxu0 0.0
        %573 = vmatprep.subr.mxu0 0.0
        %574 = vmatpush1.xpose.msra.mxu0 0.0
        %575 = vmatprep.subr.mxu0 0.0
        %576 = vmatpush1.xpose.msra.mxu0 0.0
        %577 = vmatprep.mubr.f32.mxu0 0.0
        %578 = vmatmul.mubr.f32.gmra.mrb[0].mxu0 %v508
        %v579 = vpop.f32.mrb[0].mxu0
        %v580 = vadd.f32 0.0, %v579
        %v581 = vpop.f32.mrb[0].mxu0
        %582 = vdwg.mxu0
        %v583 = vmul.f32 %v352, 0.17677669
        %v584 = vmul.f32 %v428, 0.17677669
        %v585 = vmul.f32 %v504, 0.17677669
        %v586 = vmul.f32 %v580, 0.17677669
        %vm587 = vcmask 64512
        %v588 = vsel %vm587, %v583, -inf
        %589 = vmax.xlane.f32.xlu0 %v588
        %v590 = vpop.xlane.xlu0 %589
        %v591 = vsel %vm587, %v584, -inf
        %592 = vmax.xlane.f32.xlu0 %v591
        %v593 = vpop.xlane.xlu0 %592
        %v594 = vsel %vm587, %v585, -inf
        %595 = vmax.xlane.f32.xlu0 %v594
        %v596 = vpop.xlane.xlu0 %595
        %v597 = vsel %vm587, %v586, -inf
        %598 = vmax.xlane.f32.xlu0 %v597
        %v599 = vpop.xlane.xlu0 %598
        %v600 = vsub.f32 %v583, %v590
        %v601 = vsub.f32 %v584, %v593
        %v602 = vsub.f32 %v585, %v596
        %v603 = vsub.f32 %v586, %v599
        %v604 = vmul.f32 %v600, 1.442695
        %v605 = vpow.pop %v604
        %v606 = vmul.f32 %v601, 1.442695
        %v607 = vpow.pop %v606
        %v608 = vmul.f32 %v602, 1.442695
        %v609 = vpow.pop %v608
        %v610 = vmul.f32 %v603, 1.442695
        %v611 = vpow.pop %v610
        %v612 = vsel %vm587, %v605, 0.0
        %613 = vadd.xlane.f32.xlu0 %v612
        %v614 = vpop.xlane.xlu0 %613
        %v615 = vsel %vm587, %v607, 0.0
        %616 = vadd.xlane.f32.xlu0 %v615
        %v617 = vpop.xlane.xlu0 %616
        %v618 = vsel %vm587, %v609, 0.0
        %619 = vadd.xlane.f32.xlu0 %v618
        %v620 = vpop.xlane.xlu0 %619
        %v621 = vsel %vm587, %v611, 0.0
        %622 = vadd.xlane.f32.xlu0 %v621
        %v623 = vpop.xlane.xlu0 %622
        %v624 = vrcp.pop %v614
        %v625 = vmul.f32 %v605, %v624
        %v626 = vrcp.pop %v617
        %v627 = vmul.f32 %v607, %v626
        %v628 = vrcp.pop %v620
        %v629 = vmul.f32 %v609, %v628
        %v630 = vrcp.pop %v623
        %v631 = vmul.f32 %v611, %v630
        %v633 = vsel %vm587, %v625, 0
        %635 = vmatprep.subr.mxu0 0.0
        %636 = vmatpush1.msra.mxu0 %v274
        %637 = vmatprep.subr.mxu0 0.0
        %638 = vmatpush1.msra.mxu0 0.0
        %639 = vmatprep.subr.mxu0 0.0
        %640 = vmatpush1.msra.mxu0 0.0
        %641 = vmatprep.subr.mxu0 0.0
        %642 = vmatpush1.msra.mxu0 0.0
        %643 = vmatprep.subr.mxu0 0.0
        %644 = vmatpush1.msra.mxu0 0.0
        %645 = vmatprep.subr.mxu0 0.0
        %646 = vmatpush1.msra.mxu0 0.0
        %647 = vmatprep.subr.mxu0 0.0
        %648 = vmatpush1.msra.mxu0 0.0
        %649 = vmatprep.subr.mxu0 0.0
        %650 = vmatpush1.msra.mxu0 0.0
        %651 = vmatprep.subr.mxu0 0.0
        %652 = vmatpush1.msra.mxu0 0.0
        %653 = vmatprep.subr.mxu0 0.0
        %654 = vmatpush1.msra.mxu0 0.0
        %655 = vmatprep.subr.mxu0 0.0
        %656 = vmatpush1.msra.mxu0 0.0
        %657 = vmatprep.subr.mxu0 0.0
        %658 = vmatpush1.msra.mxu0 0.0
        %659 = vmatprep.subr.mxu0 0.0
        %660 = vmatpush1.msra.mxu0 0.0
        %661 = vmatprep.subr.mxu0 0.0
        %662 = vmatpush1.msra.mxu0 0.0
        %663 = vmatprep.subr.mxu0 0.0
        %664 = vmatpush1.msra.mxu0 0.0
        %665 = vmatprep.subr.mxu0 0.0
        %666 = vmatpush1.msra.mxu0 0.0
        %667 = vmatprep.subr.mxu0 0.0
        %668 = vmatpush1.msra.mxu0 0.0
        %669 = vmatprep.subr.mxu0 0.0
        %670 = vmatpush1.msra.mxu0 0.0
        %671 = vmatprep.subr.mxu0 0.0
        %672 = vmatpush1.msra.mxu0 0.0
        %673 = vmatprep.subr.mxu0 0.0
        %674 = vmatpush1.msra.mxu0 0.0
        %675 = vmatprep.subr.mxu0 0.0
        %676 = vmatpush1.msra.mxu0 0.0
        %677 = vmatprep.subr.mxu0 0.0
        %678 = vmatpush1.msra.mxu0 0.0
        %679 = vmatprep.subr.mxu0 0.0
        %680 = vmatpush1.msra.mxu0 0.0
        %681 = vmatprep.subr.mxu0 0.0
        %682 = vmatpush1.msra.mxu0 0.0
        %683 = vmatprep.subr.mxu0 0.0
        %684 = vmatpush1.msra.mxu0 0.0
        %685 = vmatprep.subr.mxu0 0.0
        %686 = vmatpush1.msra.mxu0 0.0
        %687 = vmatprep.subr.mxu0 0.0
        %688 = vmatpush1.msra.mxu0 0.0
        %689 = vmatprep.subr.mxu0 0.0
        %690 = vmatpush1.msra.mxu0 0.0
        %691 = vmatprep.subr.mxu0 0.0
        %692 = vmatpush1.msra.mxu0 0.0
        %693 = vmatprep.subr.mxu0 0.0
        %694 = vmatpush1.msra.mxu0 0.0
        %695 = vmatprep.subr.mxu0 0.0
        %696 = vmatpush1.msra.mxu0 0.0
        %697 = vmatprep.subr.mxu0 0.0
        %698 = vmatpush1.msra.mxu0 0.0
        %699 = vmatprep.mubr.f32.mxu0 0.0
        %700 = vmatmul.mubr.f32.gmra.mrb[0].mxu0 %v633
        %v701 = vpop.f32.mrb[0].mxu0
        %v702 = vadd.f32 0.0, %v701
        %v703 = vpop.f32.mrb[0].mxu0
        %704 = vdwg.mxu0
        %v706 = vsel %vm587, %v627, 0
        %708 = vmatprep.subr.mxu0 0.0
        %709 = vmatpush1.msra.mxu0 %v275
        %710 = vmatprep.subr.mxu0 0.0
        %711 = vmatpush1.msra.mxu0 0.0
        %712 = vmatprep.subr.mxu0 0.0
        %713 = vmatpush1.msra.mxu0 0.0
        %714 = vmatprep.subr.mxu0 0.0
        %715 = vmatpush1.msra.mxu0 0.0
        %716 = vmatprep.subr.mxu0 0.0
        %717 = vmatpush1.msra.mxu0 0.0
        %718 = vmatprep.subr.mxu0 0.0
        %719 = vmatpush1.msra.mxu0 0.0
        %720 = vmatprep.subr.mxu0 0.0
        %721 = vmatpush1.msra.mxu0 0.0
        %722 = vmatprep.subr.mxu0 0.0
        %723 = vmatpush1.msra.mxu0 0.0
        %724 = vmatprep.subr.mxu0 0.0
        %725 = vmatpush1.msra.mxu0 0.0
        %726 = vmatprep.subr.mxu0 0.0
        %727 = vmatpush1.msra.mxu0 0.0
        %728 = vmatprep.subr.mxu0 0.0
        %729 = vmatpush1.msra.mxu0 0.0
        %730 = vmatprep.subr.mxu0 0.0
        %731 = vmatpush1.msra.mxu0 0.0
        %732 = vmatprep.subr.mxu0 0.0
        %733 = vmatpush1.msra.mxu0 0.0
        %734 = vmatprep.subr.mxu0 0.0
        %735 = vmatpush1.msra.mxu0 0.0
        %736 = vmatprep.subr.mxu0 0.0
        %737 = vmatpush1.msra.mxu0 0.0
        %738 = vmatprep.subr.mxu0 0.0
        %739 = vmatpush1.msra.mxu0 0.0
        %740 = vmatprep.subr.mxu0 0.0
        %741 = vmatpush1.msra.mxu0 0.0
        %742 = vmatprep.subr.mxu0 0.0
        %743 = vmatpush1.msra.mxu0 0.0
        %744 = vmatprep.subr.mxu0 0.0
        %745 = vmatpush1.msra.mxu0 0.0
        %746 = vmatprep.subr.mxu0 0.0
        %747 = vmatpush1.msra.mxu0 0.0
        %748 = vmatprep.subr.mxu0 0.0
        %749 = vmatpush1.msra.mxu0 0.0
        %750 = vmatprep.subr.mxu0 0.0
        %751 = vmatpush1.msra.mxu0 0.0
        %752 = vmatprep.subr.mxu0 0.0
        %753 = vmatpush1.msra.mxu0 0.0
        %754 = vmatprep.subr.mxu0 0.0
        %755 = vmatpush1.msra.mxu0 0.0
        %756 = vmatprep.subr.mxu0 0.0
        %757 = vmatpush1.msra.mxu0 0.0
        %758 = vmatprep.subr.mxu0 0.0
        %759 = vmatpush1.msra.mxu0 0.0
        %760 = vmatprep.subr.mxu0 0.0
        %761 = vmatpush1.msra.mxu0 0.0
        %762 = vmatprep.subr.mxu0 0.0
        %763 = vmatpush1.msra.mxu0 0.0
        %764 = vmatprep.subr.mxu0 0.0
        %765 = vmatpush1.msra.mxu0 0.0
        %766 = vmatprep.subr.mxu0 0.0
        %767 = vmatpush1.msra.mxu0 0.0
        %768 = vmatprep.subr.mxu0 0.0
        %769 = vmatpush1.msra.mxu0 0.0
        %770 = vmatprep.subr.mxu0 0.0
        %771 = vmatpush1.msra.mxu0 0.0
        %772 = vmatprep.mubr.f32.mxu0 0.0
        %773 = vmatmul.mubr.f32.gmra.mrb[0].mxu0 %v706
        %v774 = vpop.f32.mrb[0].mxu0
        %v775 = vadd.f32 0.0, %v774
        %v776 = vpop.f32.mrb[0].mxu0
        %777 = vdwg.mxu0
        %v779 = vsel %vm587, %v629, 0
        %781 = vmatprep.subr.mxu0 0.0
        %782 = vmatpush1.msra.mxu0 %v276
        %783 = vmatprep.subr.mxu0 0.0
        %784 = vmatpush1.msra.mxu0 0.0
        %785 = vmatprep.subr.mxu0 0.0
        %786 = vmatpush1.msra.mxu0 0.0
        %787 = vmatprep.subr.mxu0 0.0
        %788 = vmatpush1.msra.mxu0 0.0
        %789 = vmatprep.subr.mxu0 0.0
        %790 = vmatpush1.msra.mxu0 0.0
        %791 = vmatprep.subr.mxu0 0.0
        %792 = vmatpush1.msra.mxu0 0.0
        %793 = vmatprep.subr.mxu0 0.0
        %794 = vmatpush1.msra.mxu0 0.0
        %795 = vmatprep.subr.mxu0 0.0
        %796 = vmatpush1.msra.mxu0 0.0
        %797 = vmatprep.subr.mxu0 0.0
        %798 = vmatpush1.msra.mxu0 0.0
        %799 = vmatprep.subr.mxu0 0.0
        %800 = vmatpush1.msra.mxu0 0.0
        %801 = vmatprep.subr.mxu0 0.0
        %802 = vmatpush1.msra.mxu0 0.0
        %803 = vmatprep.subr.mxu0 0.0
        %804 = vmatpush1.msra.mxu0 0.0
        %805 = vmatprep.subr.mxu0 0.0
        %806 = vmatpush1.msra.mxu0 0.0
        %807 = vmatprep.subr.mxu0 0.0
        %808 = vmatpush1.msra.mxu0 0.0
        %809 = vmatprep.subr.mxu0 0.0
        %810 = vmatpush1.msra.mxu0 0.0
        %811 = vmatprep.subr.mxu0 0.0
        %812 = vmatpush1.msra.mxu0 0.0
        %813 = vmatprep.subr.mxu0 0.0
        %814 = vmatpush1.msra.mxu0 0.0
        %815 = vmatprep.subr.mxu0 0.0
        %816 = vmatpush1.msra.mxu0 0.0
        %817 = vmatprep.subr.mxu0 0.0
        %818 = vmatpush1.msra.mxu0 0.0
        %819 = vmatprep.subr.mxu0 0.0
        %820 = vmatpush1.msra.mxu0 0.0
        %821 = vmatprep.subr.mxu0 0.0
        %822 = vmatpush1.msra.mxu0 0.0
        %823 = vmatprep.subr.mxu0 0.0
        %824 = vmatpush1.msra.mxu0 0.0
        %825 = vmatprep.subr.mxu0 0.0
        %826 = vmatpush1.msra.mxu0 0.0
        %827 = vmatprep.subr.mxu0 0.0
        %828 = vmatpush1.msra.mxu0 0.0
        %829 = vmatprep.subr.mxu0 0.0
        %830 = vmatpush1.msra.mxu0 0.0
        %831 = vmatprep.subr.mxu0 0.0
        %832 = vmatpush1.msra.mxu0 0.0
        %833 = vmatprep.subr.mxu0 0.0
        %834 = vmatpush1.msra.mxu0 0.0
        %835 = vmatprep.subr.mxu0 0.0
        %836 = vmatpush1.msra.mxu0 0.0
        %837 = vmatprep.subr.mxu0 0.0
        %838 = vmatpush1.msra.mxu0 0.0
        %839 = vmatprep.subr.mxu0 0.0
        %840 = vmatpush1.msra.mxu0 0.0
        %841 = vmatprep.subr.mxu0 0.0
        %842 = vmatpush1.msra.mxu0 0.0
        %843 = vmatprep.subr.mxu0 0.0
        %844 = vmatpush1.msra.mxu0 0.0
        %845 = vmatprep.mubr.f32.mxu0 0.0
        %846 = vmatmul.mubr.f32.gmra.mrb[0].mxu0 %v779
        %v847 = vpop.f32.mrb[0].mxu0
        %v848 = vadd.f32 0.0, %v847
        %v849 = vpop.f32.mrb[0].mxu0
        %850 = vdwg.mxu0
        %v852 = vsel %vm587, %v631, 0
        %854 = vmatprep.subr.mxu0 0.0
        %855 = vmatpush1.msra.mxu0 %v277
        %856 = vmatprep.subr.mxu0 0.0
        %857 = vmatpush1.msra.mxu0 0.0
        %858 = vmatprep.subr.mxu0 0.0
        %859 = vmatpush1.msra.mxu0 0.0
        %860 = vmatprep.subr.mxu0 0.0
        %861 = vmatpush1.msra.mxu0 0.0
        %862 = vmatprep.subr.mxu0 0.0
        %863 = vmatpush1.msra.mxu0 0.0
        %864 = vmatprep.subr.mxu0 0.0
        %865 = vmatpush1.msra.mxu0 0.0
        %866 = vmatprep.subr.mxu0 0.0
        %867 = vmatpush1.msra.mxu0 0.0
        %868 = vmatprep.subr.mxu0 0.0
        %869 = vmatpush1.msra.mxu0 0.0
        %870 = vmatprep.subr.mxu0 0.0
        %871 = vmatpush1.msra.mxu0 0.0
        %872 = vmatprep.subr.mxu0 0.0
        %873 = vmatpush1.msra.mxu0 0.0
        %874 = vmatprep.subr.mxu0 0.0
        %875 = vmatpush1.msra.mxu0 0.0
        %876 = vmatprep.subr.mxu0 0.0
        %877 = vmatpush1.msra.mxu0 0.0
        %878 = vmatprep.subr.mxu0 0.0
        %879 = vmatpush1.msra.mxu0 0.0
        %880 = vmatprep.subr.mxu0 0.0
        %881 = vmatpush1.msra.mxu0 0.0
        %882 = vmatprep.subr.mxu0 0.0
        %883 = vmatpush1.msra.mxu0 0.0
        %884 = vmatprep.subr.mxu0 0.0
        %885 = vmatpush1.msra.mxu0 0.0
        %886 = vmatprep.subr.mxu0 0.0
        %887 = vmatpush1.msra.mxu0 0.0
        %888 = vmatprep.subr.mxu0 0.0
        %889 = vmatpush1.msra.mxu0 0.0
        %890 = vmatprep.subr.mxu0 0.0
        %891 = vmatpush1.msra.mxu0 0.0
        %892 = vmatprep.subr.mxu0 0.0
        %893 = vmatpush1.msra.mxu0 0.0
        %894 = vmatprep.subr.mxu0 0.0
        %895 = vmatpush1.msra.mxu0 0.0
        %896 = vmatprep.subr.mxu0 0.0
        %897 = vmatpush1.msra.mxu0 0.0
        %898 = vmatprep.subr.mxu0 0.0
        %899 = vmatpush1.msra.mxu0 0.0
        %900 = vmatprep.subr.mxu0 0.0
        %901 = vmatpush1.msra.mxu0 0.0
        %902 = vmatprep.subr.mxu0 0.0
        %903 = vmatpush1.msra.mxu0 0.0
        %904 = vmatprep.subr.mxu0 0.0
        %905 = vmatpush1.msra.mxu0 0.0
        %906 = vmatprep.subr.mxu0 0.0
        %907 = vmatpush1.msra.mxu0 0.0
        %908 = vmatprep.subr.mxu0 0.0
        %909 = vmatpush1.msra.mxu0 0.0
        %910 = vmatprep.subr.mxu0 0.0
        %911 = vmatpush1.msra.mxu0 0.0
        %912 = vmatprep.subr.mxu0 0.0
        %913 = vmatpush1.msra.mxu0 0.0
        %914 = vmatprep.subr.mxu0 0.0
        %915 = vmatpush1.msra.mxu0 0.0
        %916 = vmatprep.subr.mxu0 0.0
        %917 = vmatpush1.msra.mxu0 0.0
        %918 = vmatprep.mubr.f32.mxu0 0.0
        %919 = vmatmul.mubr.f32.gmra.mrb[0].mxu0 %v852
        %v920 = vpop.f32.mrb[0].mxu0
        %v921 = vadd.f32 0.0, %v920
        %v922 = vpop.f32.mrb[0].mxu0
        %923 = vdwg.mxu0
        %924 = vst.msk [vmem:[%s265] sm:$0xff] %vm278, %v702
        %925 = vst.msk [vmem:[%s265 + $0x8] sm:$0xff] %vm278, %v775
        %926 = vst.msk [vmem:[%s265 + $0x10] sm:$0xff] %vm278, %v848
        %927 = vst.msk [vmem:[%s265 + $0x18] sm:$0xff] %vm278, %v921
        %s928 = sand.u32 %s109, 1
        %s929 = scalar_lea.sflag [#allocation4], %s928
        %s930 = sand.u32 %s109, 1
        %s931 = smul.addr %s930, 32
        %s932 = scalar_lea.vmem [#allocation8], %s931
        // Predicated region
        $region45: #{tpu_custom_call.1} parent=31 // pred_check
          %p933 = pneg %p119
        $region46: #{tpu_custom_call.1} parent=31 // pred_check_branch
          %935 = sbr.rel (%p933) target = $region48
        $region47: #{tpu_custom_call.1} parent=31 // pred_region
          %s937 = ssub.s32 512, 512
          %938 = vsyncadd %s929, %s937
          %s939 = smul.addr %s23, 4
          %s940 = smul.addr %s939, 128
          %s941 = scalar_lea.hbm %s3, %s940
          %s942 = sshll.u32 %s932, 4
          %s943 = int_to_ptr.vmem [resolvable:$true] %s942
          %948 = dma.vmem_to_hbm [thread:$0]  %s943, 512, %s941, %s929, 128, 128, 8
        $region48: #{tpu_custom_call.1} parent=31 // pred_fallthru
          _
      $region32: #{tpu_custom_call.1} parent=5 // pred_fallthru
        _
      %p949 = scmp.le.s32.totalorder 2, %s18
      // Predicated region
      $region49: #{tpu_custom_call.1} parent=5 // pred_check
        %p950 = pneg %p949
      $region50: #{tpu_custom_call.1} parent=5 // pred_check_branch
        %952 = sbr.rel (%p950) target = $region52
      $region51: #{tpu_custom_call.1} parent=5 // pred_region
        %s953 = ssub.s32 %s18, 2
        // Predicated region
        $region53: #{tpu_custom_call.1} parent=51 // pred_check
          %p954 = pneg %p125
        $region54: #{tpu_custom_call.1} parent=51 // pred_check_branch
          %956 = sbr.rel (%p954) target = $region56
        $region55: #{tpu_custom_call.1} parent=51 // pred_region
          %s957 = sand.u32 %s110, 1
          %s958 = scalar_lea.sflag [#allocation4], %s957
          %s959 = sand.u32 %s110, 1
          %s960 = smul.addr %s959, 32
          %s961 = scalar_lea.vmem [#allocation8], %s960
          %962 = dma.done %s958, 512
        $region56: #{tpu_custom_call.1} parent=51 // pred_fallthru
          _
      $region52: #{tpu_custom_call.1} parent=5 // pred_fallthru
        _
    $region6: #{tpu_custom_call.1} parent=1 // loop_footer
      %s22 = sadd.s32 1, %s18
    $region7: #{tpu_custom_call.1} parent=1 // loop_footer_branch
      %17 = sbr.rel target = $region3
    $region8: #{tpu_custom_call.1} parent=1 // loop_exit
      _
    %963 = vsyncpa [#allocation3], 1
    %s964 = scalar_lea.sflag [#allocation3], 1
    %965 = vsyncpa %s964, 1
    %966 = vsyncpa [#allocation6], 1
    %s967 = scalar_lea.sflag [#allocation6], 1
    %968 = vsyncpa %s967, 1
    %969 = vsyncpa [#allocation4], 1
    %s970 = scalar_lea.sflag [#allocation4], 1
    %971 = vsyncpa %s970, 1

</llo_original>
